<compile_context>
chip_gen: v6e
topology: v6e:2x2x1
jax: 0.10.0
libtpu: 0.0.40
codegen_flags: <defaults>
</compile_context>

<pallas_src>
import functools

import jax
import jax.numpy as jnp
from jax.experimental import pallas as pl
from jax.experimental.pallas import tpu as pltpu


def _fused_kernel(x_ref, skip_ref, w_ref, s1_ref, b1_ref, b2_ref, o_ref, acc_ref):
    """bn1 + add + relu + (1x1 conv == matmul, bn2 scale pre-folded) + bn2 shift.

    Grid: (Cout tiles, N, Cin tiles).  acc_ref is an f32 VMEM scratch resident
    across the k (reduction) axis; the output is written once at k == last.
    """
    k = pl.program_id(2)
    nk = pl.num_programs(2)

    # bn1 (folded per-input-channel scale/shift) + residual add + relu, in f32.
    x = x_ref[0] * s1_ref[...] + b1_ref[...]            # (tk, HW) * (tk, 1)
    x = jnp.maximum(x + skip_ref[0], 0.0)

    # 1x1 conv k-slice: (tcout, tk) @ (tk, HW) on the MXU, bf16 in, f32 acc.
    # Weight stays resident in VMEM; k-chunk picked by a leading-dim index.
    partial = jnp.dot(w_ref[k], x.astype(w_ref.dtype),
                      preferred_element_type=jnp.float32)

    @pl.when(k == 0)
    def _():
        # Merge the bn2 shift into the first accumulation step.
        acc_ref[...] = partial + b2_ref[...]

    @pl.when(k > 0)
    def _():
        acc_ref[...] += partial

    @pl.when(k == nk - 1)
    def _():
        o_ref[0] = acc_ref[...].astype(o_ref.dtype)


def _pick_tk(cin, tk_max):
    """Largest 8-aligned divisor of cin that is <= tk_max (fallback: full cin)."""
    tk_max = min(tk_max, cin)
    for cand in range(tk_max, 7, -1):
        if cin % cand == 0 and cand % 8 == 0:
            return cand
    return cin


@functools.partial(jax.jit,
                   static_argnames=("tk", "cout_tile", "eps", "out_dtype"))
def fused_forward(x321, x320, bn1_gamma, bn1_beta, bn1_mean, bn1_var,
                  conv_w, bn2_gamma, bn2_beta, bn2_mean, bn2_var,
                  *, tk=1024, cout_tile=None, eps=1e-5, out_dtype=jnp.float32):
    """x321, x320: (N, Cin, H, W) f32.  conv_w: (Cout, Cin, 1, 1).

    cout_tile: pass 256 on v7x to split Cout across both TensorCores.
    out_dtype: pass jnp.bfloat16 if the consumer accepts it (halves HBM writes).
    """
    N, Cin, H, W = x321.shape
    Cout = conv_w.shape[0]
    HW = H * W

    # Free reshapes of contiguous NCHW tensors -- no transposes anywhere.
    x = x321.reshape(N, Cin, HW)
    skip = x320.reshape(N, Cin, HW)

    # Fold batchnorms into per-channel scale/shift (eval-mode semantics).
    s1 = bn1_gamma * jax.lax.rsqrt(bn1_var + eps)     # (Cin,)
    b1 = bn1_beta - bn1_mean * s1                     # (Cin,)
    s2 = bn2_gamma * jax.lax.rsqrt(bn2_var + eps)     # (Cout,)
    b2 = bn2_beta - bn2_mean * s2                     # (Cout,)

    tk = _pick_tk(Cin, tk)
    kt = Cin // tk

    if cout_tile is None or Cout % cout_tile != 0 or cout_tile % 8 != 0:
        tcout = Cout
    else:
        tcout = cout_tile
    ct = Cout // tcout

    # Fold bn2's scale into the 1x1-conv weight; lay out as (kt, Cout, tk) bf16
    # so it is held fully resident in VMEM and sliced by k inside the kernel.
    # (One-time weight preprocessing in deployment.)
    w = conv_w.reshape(Cout, Cin) * s2[:, None]
    w = w.reshape(Cout, kt, tk).transpose(1, 0, 2).astype(jnp.bfloat16)

    s1 = s1.reshape(Cin, 1).astype(jnp.float32)
    b1 = b1.reshape(Cin, 1).astype(jnp.float32)
    b2 = b2.reshape(Cout, 1).astype(jnp.float32)

    grid = (ct, N, kt)

    out_flat = pl.pallas_call(
        _fused_kernel,
        out_shape=jax.ShapeDtypeStruct((N, Cout, HW), out_dtype),
        grid_spec=pltpu.PrefetchScalarGridSpec(
            num_scalar_prefetch=0,
            grid=grid,
            in_specs=[
                pl.BlockSpec((1, tk, HW), lambda co, n, k: (n, k, 0)),      # x
                pl.BlockSpec((1, tk, HW), lambda co, n, k: (n, k, 0)),      # skip
                pl.BlockSpec((kt, tcout, tk), lambda co, n, k: (0, co, 0)), # w (resident)
                pl.BlockSpec((tk, 1), lambda co, n, k: (k, 0)),             # s1
                pl.BlockSpec((tk, 1), lambda co, n, k: (k, 0)),             # b1
                pl.BlockSpec((tcout, 1), lambda co, n, k: (co, 0)),         # b2
            ],
            out_specs=pl.BlockSpec((1, tcout, HW), lambda co, n, k: (n, co, 0)),
            scratch_shapes=[pltpu.VMEM((tcout, HW), jnp.float32)],
        ),
        compiler_params=pltpu.CompilerParams(
            dimension_semantics=("parallel", "parallel", "arbitrary"),
            vmem_limit_bytes=32 * 1024 * 1024),
    )(x, skip, w, s1, b1, b2)

    # (N, Cout, HW) -> NCHW: free reshape.
    return out_flat.reshape(N, Cout, H, W)


def _reference(x321, x320, g1, be1, m1, v1, w, g2, be2, m2, v2, eps=1e-5):
    s1 = (g1 / jnp.sqrt(v1 + eps))[None, :, None, None]
    b1 = be1[None, :, None, None] - m1[None, :, None, None] * s1
    x = x321 * s1 + b1
    x = jnp.maximum(x + x320, 0.0)
    y = jnp.einsum("nchw,oc->nohw", x, w.reshape(w.shape[0], w.shape[1]))
    s2 = (g2 / jnp.sqrt(v2 + eps))[None, :, None, None]
    b2 = be2[None, :, None, None] - m2[None, :, None, None] * s2
    return y * s2 + b2


if __name__ == "__main__":
    # Small shapes consistent with the module (full-size is 1x2048x28x28 -> 512).
    N, Cin, Cout, H, W = 2, 256, 128, 8, 8

    key = jax.random.PRNGKey(0)
    ks = jax.random.split(key, 11)
    x321 = jax.random.normal(ks[0], (N, Cin, H, W), jnp.float32)
    x320 = jax.random.normal(ks[1], (N, Cin, H, W), jnp.float32)

    bn1_gamma = jax.random.normal(ks[2], (Cin,), jnp.float32) * 0.1 + 1.0
    bn1_beta = jax.random.normal(ks[3], (Cin,), jnp.float32) * 0.1
    bn1_mean = jax.random.normal(ks[4], (Cin,), jnp.float32) * 0.1
    bn1_var = jax.random.uniform(ks[5], (Cin,), jnp.float32, 0.5, 1.5)

    conv_w = jax.random.normal(ks[6], (Cout, Cin, 1, 1), jnp.float32) * 0.02

    bn2_gamma = jax.random.normal(ks[7], (Cout,), jnp.float32) * 0.1 + 1.0
    bn2_beta = jax.random.normal(ks[8], (Cout,), jnp.float32) * 0.1
    bn2_mean = jax.random.normal(ks[9], (Cout,), jnp.float32) * 0.1
    bn2_var = jax.random.uniform(ks[10], (Cout,), jnp.float32, 0.5, 1.5)

    ref = _reference(x321, x320, bn1_gamma, bn1_beta, bn1_mean, bn1_var,
                     conv_w, bn2_gamma, bn2_beta, bn2_mean, bn2_var)

    # Default config (no Cout split -- v5e/v6e path).
    out = fused_forward(x321, x320, bn1_gamma, bn1_beta, bn1_mean, bn1_var,
                        conv_w, bn2_gamma, bn2_beta, bn2_mean, bn2_var)
    out = jax.block_until_ready(out)
    assert out.shape == (N, Cout, H, W)
    err = float(jnp.max(jnp.abs(out - ref)))
    assert jnp.allclose(out, ref, atol=3e-2, rtol=3e-2), err

    # Cout-split config (exercises the v7x dual-TensorCore path: 2 Cout tiles).
    out2 = fused_forward(x321, x320, bn1_gamma, bn1_beta, bn1_mean, bn1_var,
                         conv_w, bn2_gamma, bn2_beta, bn2_mean, bn2_var,
                         cout_tile=64)
    out2 = jax.block_until_ready(out2)
    err2 = float(jnp.max(jnp.abs(out2 - ref)))
    assert jnp.allclose(out2, ref, atol=3e-2, rtol=3e-2), err2

    print("KERNEL_OK")
</pallas_src>

<mosaic_0001>
module attributes {stable_mosaic.version = 11 : i64} {
  func.func @_fused_kernel(%arg0: i32, %arg1: i32, %arg2: i32, %arg3: memref<1x256x64xf32, #tpu.memory_space<vmem>>, %arg4: memref<1x256x64xf32, #tpu.memory_space<vmem>>, %arg5: memref<1x128x256xbf16, #tpu.memory_space<vmem>>, %arg6: memref<256x1xf32, #tpu.memory_space<vmem>>, %arg7: memref<256x1xf32, #tpu.memory_space<vmem>>, %arg8: memref<128x1xf32, #tpu.memory_space<vmem>>, %arg9: memref<1x128x64xf32, #tpu.memory_space<vmem>>, %arg10: memref<128x64xf32, #tpu.memory_space<vmem>>) attributes {dimension_semantics = [#tpu.dimension_semantics<parallel>, #tpu.dimension_semantics<parallel>, #tpu.dimension_semantics<arbitrary>], iteration_bounds = array<i64: 1, 2, 1>, scalar_prefetch = 0 : i64, scratch_operands = 1 : i64, tpu.core_type = #tpu.core_type<tc>, window_params = [{transform_indices = @transform_0, window_bounds = array<i64: 1, 256, 64>}, {transform_indices = @transform_1, window_bounds = array<i64: 1, 256, 64>}, {transform_indices = @transform_2, window_bounds = array<i64: 1, 128, 256>}, {transform_indices = @transform_3, window_bounds = array<i64: 256, 1>}, {transform_indices = @transform_4, window_bounds = array<i64: 256, 1>}, {transform_indices = @transform_5, window_bounds = array<i64: 128, 1>}, {transform_indices = @transform_6, window_bounds = array<i64: 1, 128, 64>}]} {
    %c0 = arith.constant 0 : index
    %c0_0 = arith.constant 0 : index
    %c0_1 = arith.constant 0 : index
    %0 = vector.load %arg3[%c0, %c0_0, %c0_1] : memref<1x256x64xf32, #tpu.memory_space<vmem>>, vector<1x256x64xf32>
    %1 = vector.shape_cast %0 : vector<1x256x64xf32> to vector<256x64xf32>
    %c0_2 = arith.constant 0 : index
    %c0_3 = arith.constant 0 : index
    %2 = vector.load %arg6[%c0_2, %c0_3] : memref<256x1xf32, #tpu.memory_space<vmem>>, vector<256x1xf32>
    %3 = vector.broadcast %2 : vector<256x1xf32> to vector<256x64xf32>
    %4 = arith.mulf %1, %3 : vector<256x64xf32>
    %c0_4 = arith.constant 0 : index
    %c0_5 = arith.constant 0 : index
    %5 = vector.load %arg7[%c0_4, %c0_5] : memref<256x1xf32, #tpu.memory_space<vmem>>, vector<256x1xf32>
    %6 = vector.broadcast %5 : vector<256x1xf32> to vector<256x64xf32>
    %7 = arith.addf %4, %6 : vector<256x64xf32>
    %c0_6 = arith.constant 0 : index
    %c0_7 = arith.constant 0 : index
    %c0_8 = arith.constant 0 : index
    %8 = vector.load %arg4[%c0_6, %c0_7, %c0_8] : memref<1x256x64xf32, #tpu.memory_space<vmem>>, vector<1x256x64xf32>
    %9 = vector.shape_cast %8 : vector<1x256x64xf32> to vector<256x64xf32>
    %10 = arith.addf %7, %9 : vector<256x64xf32>
    %cst = arith.constant 0.000000e+00 : f32
    %11 = vector.broadcast %cst : f32 to vector<256x64xf32>
    %12 = arith.maximumf %10, %11 : vector<256x64xf32>
    %13 = arith.index_cast %arg2 : i32 to index
    %c0_9 = arith.constant 0 : index
    %c0_10 = arith.constant 0 : index
    %14 = vector.load %arg5[%13, %c0_9, %c0_10] : memref<1x128x256xbf16, #tpu.memory_space<vmem>>, vector<1x128x256xbf16>
    %15 = vector.shape_cast %14 : vector<1x128x256xbf16> to vector<128x256xbf16>
    %16 = arith.truncf %12 : vector<256x64xf32> to vector<256x64xbf16>
    %cst_11 = arith.constant dense<0.000000e+00> : vector<128x64xf32>
    %17 = tpu.matmul %15, %16, %cst_11 {dimension_numbers = #tpu.dot_dimension_numbers<[1], [0], [0], [1], [0, 0, 1, 1], [], []>} : vector<128x256xbf16>, vector<256x64xbf16>, vector<128x64xf32> -> vector<128x64xf32>
    %c0_i32 = arith.constant 0 : i32
    %18 = arith.cmpi eq, %arg2, %c0_i32 : i32
    %19 = arith.extui %18 : i1 to i32
    %c0_i32_12 = arith.constant 0 : i32
    %20 = arith.cmpi ne, %19, %c0_i32_12 : i32
    scf.if %20 {
      %c0_17 = arith.constant 0 : index
      %c0_18 = arith.constant 0 : index
      %27 = vector.load %arg8[%c0_17, %c0_18] : memref<128x1xf32, #tpu.memory_space<vmem>>, vector<128x1xf32>
      %28 = vector.broadcast %27 : vector<128x1xf32> to vector<128x64xf32>
      %29 = arith.addf %17, %28 : vector<128x64xf32>
      %c0_19 = arith.constant 0 : index
      %c0_20 = arith.constant 0 : index
      %30 = vector.load %arg10[%c0_19, %c0_20] : memref<128x64xf32, #tpu.memory_space<vmem>>, vector<128x64xf32>
      tpu.vector_store %arg10[%c0_19, %c0_20], %29 {strides = array<i32>} : memref<128x64xf32, #tpu.memory_space<vmem>>, vector<128x64xf32>,
    } else {
    }
    %c0_i32_13 = arith.constant 0 : i32
    %21 = arith.cmpi sgt, %arg2, %c0_i32_13 : i32
    %22 = arith.extui %21 : i1 to i32
    %c0_i32_14 = arith.constant 0 : i32
    %23 = arith.cmpi ne, %22, %c0_i32_14 : i32
    scf.if %23 {
      %c0_17 = arith.constant 0 : index
      %c0_18 = arith.constant 0 : index
      %27 = vector.load %arg10[%c0_17, %c0_18] : memref<128x64xf32, #tpu.memory_space<vmem>>, vector<128x64xf32>
      %28 = arith.addf %27, %17 : vector<128x64xf32>
      %c0_19 = arith.constant 0 : index
      %c0_20 = arith.constant 0 : index
      %29 = vector.load %arg10[%c0_19, %c0_20] : memref<128x64xf32, #tpu.memory_space<vmem>>, vector<128x64xf32>
      tpu.vector_store %arg10[%c0_19, %c0_20], %28 {strides = array<i32>} : memref<128x64xf32, #tpu.memory_space<vmem>>, vector<128x64xf32>,
    } else {
    }
    %c0_i32_15 = arith.constant 0 : i32
    %24 = arith.cmpi eq, %arg2, %c0_i32_15 : i32
    %25 = arith.extui %24 : i1 to i32
    %c0_i32_16 = arith.constant 0 : i32
    %26 = arith.cmpi ne, %25, %c0_i32_16 : i32
    scf.if %26 {
      %c0_17 = arith.constant 0 : index
      %c0_18 = arith.constant 0 : index
      %27 = vector.load %arg10[%c0_17, %c0_18] : memref<128x64xf32, #tpu.memory_space<vmem>>, vector<128x64xf32>
      %c0_19 = arith.constant 0 : index
      %c0_20 = arith.constant 0 : index
      %c0_21 = arith.constant 0 : index
      %28 = vector.load %arg9[%c0_19, %c0_20, %c0_21] : memref<1x128x64xf32, #tpu.memory_space<vmem>>, vector<1x128x64xf32>
      %29 = vector.shape_cast %28 : vector<1x128x64xf32> to vector<128x64xf32>
      %30 = vector.shape_cast %27 : vector<128x64xf32> to vector<1x128x64xf32>
      tpu.vector_store %arg9[%c0_19, %c0_20, %c0_21], %30 {strides = array<i32>} : memref<1x128x64xf32, #tpu.memory_space<vmem>>, vector<1x128x64xf32>,
    } else {
    }
    return
  }
  func.func @transform_0(%arg0: i32, %arg1: i32, %arg2: i32) -> (i32, i32, i32) {
    %c0_i32 = arith.constant 0 : i32
    %c0_i32_0 = arith.constant 0 : i32
    return %arg1, %arg2, %c0_i32 : i32, i32, i32
  }
  func.func @transform_1(%arg0: i32, %arg1: i32, %arg2: i32) -> (i32, i32, i32) {
    %c0_i32 = arith.constant 0 : i32
    %c0_i32_0 = arith.constant 0 : i32
    return %arg1, %arg2, %c0_i32 : i32, i32, i32
  }
  func.func @transform_2(%arg0: i32, %arg1: i32, %arg2: i32) -> (i32, i32, i32) {
    %c0_i32 = arith.constant 0 : i32
    %c0_i32_0 = arith.constant 0 : i32
    %c0_i32_1 = arith.constant 0 : i32
    return %c0_i32, %arg0, %c0_i32_0 : i32, i32, i32
  }
  func.func @transform_3(%arg0: i32, %arg1: i32, %arg2: i32) -> (i32, i32) {
    %c0_i32 = arith.constant 0 : i32
    %c0_i32_0 = arith.constant 0 : i32
    return %arg2, %c0_i32 : i32, i32
  }
  func.func @transform_4(%arg0: i32, %arg1: i32, %arg2: i32) -> (i32, i32) {
    %c0_i32 = arith.constant 0 : i32
    %c0_i32_0 = arith.constant 0 : i32
    return %arg2, %c0_i32 : i32, i32
  }
  func.func @transform_5(%arg0: i32, %arg1: i32, %arg2: i32) -> (i32, i32) {
    %c0_i32 = arith.constant 0 : i32
    %c0_i32_0 = arith.constant 0 : i32
    return %arg0, %c0_i32 : i32, i32
  }
  func.func @transform_6(%arg0: i32, %arg1: i32, %arg2: i32) -> (i32, i32, i32) {
    %c0_i32 = arith.constant 0 : i32
    %c0_i32_0 = arith.constant 0 : i32
    return %arg1, %arg0, %c0_i32 : i32, i32, i32
  }
}

</mosaic_0001>

<llo_original>
// kernel: fused_forward.1
$region0: #{fused_forward.1}
  #allocation0 [shape = 'u32[]', space=smem, size = 0x4, offset = 0x4, fixed_abs, tag = 'smem constant byte address 0x4 - core index']
  #allocation1 [shape = 'u32[144,128]{1,0:T(1,128)}', space=vmem, size = 0x12000, scoped, tag = 'internal scratch']
  #allocation2 [shape = 'f32[128,64]{1,0:T(8,128)}', space=vmem, size = 0x10000, scoped, tag = 'scratch operand']
  %s0 = inlined_call_operand.vmem [shape: f32[2,256,64], index: 0, kind: input, shape index: {}]
  %s1 = inlined_call_operand.vmem [shape: f32[2,256,64], index: 1, kind: input, shape index: {}]
  %s2 = inlined_call_operand.vmem [shape: bf16[1,128,256], index: 2, kind: input, shape index: {}]
  %s3 = inlined_call_operand.vmem [shape: f32[256,1], index: 3, kind: input, shape index: {}]
  %s4 = inlined_call_operand.vmem [shape: f32[256,1], index: 4, kind: input, shape index: {}]
  %s5 = inlined_call_operand.vmem [shape: f32[128,1], index: 5, kind: input, shape index: {}]
  %s6 = inlined_call_operand.vmem [shape: f32[2,128,64], index: 6, kind: output, shape index: {}]
  %s7 = sld [smem:[#allocation0]]
  $region69: #{fused_forward.1} parent=0
    _
  %s9 = ssub.s32 1, %s7
  %s10 = scalar_select 0, %s9, %s7
  loop: start=0, step=1, limit=4
  $region2: #{fused_forward.1} parent=0 // loop_pre_header
    _
  $region3: #{fused_forward.1} parent=0 // loop_header
    %s12 = sphi 0, %s16
    %p13 = scmp.ge.s32.totalorder %s12, 4
    %s19 = sphi 0, %s38
    %s20 = sphi 0, %s34
    %s21 = sphi 0, %s30
    %s22 = sphi 0, %s19
    %s23 = sphi 0, %s20
    %s24 = sphi 0, %s21
    %s25 = sphi 0, %s22
    %s26 = sphi 0, %s23
    %s27 = sphi 0, %s24
    %s43 = sphi 0, %s45
    %s46 = sphi 0, %s43
    %s47 = sphi 0, %s46
    %s63 = sphi 0, %s47
    %s71 = sphi 0, %s73
    %s74 = sphi 0, %s71
    %s75 = sphi 0, %s74
    %s91 = sphi 0, %s75
    %s97 = sphi 0, %s99
    %s100 = sphi 0, %s97
    %s101 = sphi 0, %s100
    %s117 = sphi 0, %s101
    %s123 = sphi 0, %s125
    %s126 = sphi 0, %s123
    %s127 = sphi 0, %s126
    %s143 = sphi 0, %s127
    %s149 = sphi 0, %s151
    %s152 = sphi 0, %s149
    %s153 = sphi 0, %s152
    %s169 = sphi 0, %s153
    %s175 = sphi 0, %s177
    %s178 = sphi 0, %s175
    %s179 = sphi 0, %s178
    %s195 = sphi 0, %s179
    %s203 = sphi 0, %s205
    %s206 = sphi 0, %s203
    %s207 = sphi 0, %s206
    %s223 = sphi 0, %s207
  $region4: #{fused_forward.1} parent=0 // loop_header_branch
    %15 = sbr.rel (%p13) target = $region8
  $region5: #{fused_forward.1} parent=0 // loop_body
    %s17 = ssub.s32 %s12, 1
    %s18 = ssub.s32 %s12, 2
    %s28 = sadd.s32 1, %s21
    %p29 = scmp.ge.s32.totalorder %s28, 1
    %s30 = scalar_select %p29, 0, %s28
    %s31 = sadd.s32 1, %s20
    %s32 = scalar_select %p29, %s31, %s20
    %p33 = scmp.ge.s32.totalorder %s32, 2
    %s34 = scalar_select %p33, 0, %s32
    %s35 = sadd.s32 1, %s19
    %s36 = scalar_select %p33, %s35, %s19
    %p37 = scmp.ge.s32.totalorder %s36, 1
    %s38 = scalar_select %p37, 0, %s36
    %s39 = ssub.s32 %s20, %s34
    %s40 = ssub.s32 %s21, %s30
    %s41 = sor.u32 %s39, %s40
    %p42 = scmp.eq.s32.totalorder %s41, 0
    %s44 = sadd.s32 %s43, 1
    %s45 = scalar_select %p42, %s43, %s44
    %p48 = pneg %p42
    %p49 = scmp.eq.s32.totalorder %s12, 1
    %p50 = por %p48, %p49
    %p51 = scmp.ne.s32.totalorder %s43, %s46
    %p52 = scmp.eq.s32.totalorder %s12, 0
    %p53 = por %p51, %p52
    %p54 = scmp.ne.s32.totalorder %s43, %s46
    %p55 = scmp.eq.s32.totalorder %s17, 1
    %p56 = por %p54, %p55
    %p57 = scmp.ne.s32.totalorder %s46, %s47
    %p58 = scmp.eq.s32.totalorder %s17, 0
    %p59 = por %p57, %p58
    %p60 = scmp.ne.s32.totalorder %s46, %s47
    %p61 = scmp.eq.s32.totalorder %s18, 1
    %p62 = por %p60, %p61
    %p64 = scmp.ne.s32.totalorder %s47, %s63
    %p65 = scmp.eq.s32.totalorder %s18, 0
    %p66 = por %p64, %p65
    %s67 = ssub.s32 %s20, %s34
    %s68 = ssub.s32 %s21, %s30
    %s69 = sor.u32 %s67, %s68
    %p70 = scmp.eq.s32.totalorder %s69, 0
    %s72 = sadd.s32 %s71, 1
    %s73 = scalar_select %p70, %s71, %s72
    %p76 = pneg %p70
    %p77 = scmp.eq.s32.totalorder %s12, 1
    %p78 = por %p76, %p77
    %p79 = scmp.ne.s32.totalorder %s71, %s74
    %p80 = scmp.eq.s32.totalorder %s12, 0
    %p81 = por %p79, %p80
    %p82 = scmp.ne.s32.totalorder %s71, %s74
    %p83 = scmp.eq.s32.totalorder %s17, 1
    %p84 = por %p82, %p83
    %p85 = scmp.ne.s32.totalorder %s74, %s75
    %p86 = scmp.eq.s32.totalorder %s17, 0
    %p87 = por %p85, %p86
    %p88 = scmp.ne.s32.totalorder %s74, %s75
    %p89 = scmp.eq.s32.totalorder %s18, 1
    %p90 = por %p88, %p89
    %p92 = scmp.ne.s32.totalorder %s75, %s91
    %p93 = scmp.eq.s32.totalorder %s18, 0
    %p94 = por %p92, %p93
    %s95 = ssub.s32 %s19, %s38
    %p96 = scmp.eq.s32.totalorder %s95, 0
    %s98 = sadd.s32 %s97, 1
    %s99 = scalar_select %p96, %s97, %s98
    %p102 = pneg %p96
    %p103 = scmp.eq.s32.totalorder %s12, 1
    %p104 = por %p102, %p103
    %p105 = scmp.ne.s32.totalorder %s97, %s100
    %p106 = scmp.eq.s32.totalorder %s12, 0
    %p107 = por %p105, %p106
    %p108 = scmp.ne.s32.totalorder %s97, %s100
    %p109 = scmp.eq.s32.totalorder %s17, 1
    %p110 = por %p108, %p109
    %p111 = scmp.ne.s32.totalorder %s100, %s101
    %p112 = scmp.eq.s32.totalorder %s17, 0
    %p113 = por %p111, %p112
    %p114 = scmp.ne.s32.totalorder %s100, %s101
    %p115 = scmp.eq.s32.totalorder %s18, 1
    %p116 = por %p114, %p115
    %p118 = scmp.ne.s32.totalorder %s101, %s117
    %p119 = scmp.eq.s32.totalorder %s18, 0
    %p120 = por %p118, %p119
    %s121 = ssub.s32 %s21, %s30
    %p122 = scmp.eq.s32.totalorder %s121, 0
    %s124 = sadd.s32 %s123, 1
    %s125 = scalar_select %p122, %s123, %s124
    %p128 = pneg %p122
    %p129 = scmp.eq.s32.totalorder %s12, 1
    %p130 = por %p128, %p129
    %p131 = scmp.ne.s32.totalorder %s123, %s126
    %p132 = scmp.eq.s32.totalorder %s12, 0
    %p133 = por %p131, %p132
    %p134 = scmp.ne.s32.totalorder %s123, %s126
    %p135 = scmp.eq.s32.totalorder %s17, 1
    %p136 = por %p134, %p135
    %p137 = scmp.ne.s32.totalorder %s126, %s127
    %p138 = scmp.eq.s32.totalorder %s17, 0
    %p139 = por %p137, %p138
    %p140 = scmp.ne.s32.totalorder %s126, %s127
    %p141 = scmp.eq.s32.totalorder %s18, 1
    %p142 = por %p140, %p141
    %p144 = scmp.ne.s32.totalorder %s127, %s143
    %p145 = scmp.eq.s32.totalorder %s18, 0
    %p146 = por %p144, %p145
    %s147 = ssub.s32 %s21, %s30
    %p148 = scmp.eq.s32.totalorder %s147, 0
    %s150 = sadd.s32 %s149, 1
    %s151 = scalar_select %p148, %s149, %s150
    %p154 = pneg %p148
    %p155 = scmp.eq.s32.totalorder %s12, 1
    %p156 = por %p154, %p155
    %p157 = scmp.ne.s32.totalorder %s149, %s152
    %p158 = scmp.eq.s32.totalorder %s12, 0
    %p159 = por %p157, %p158
    %p160 = scmp.ne.s32.totalorder %s149, %s152
    %p161 = scmp.eq.s32.totalorder %s17, 1
    %p162 = por %p160, %p161
    %p163 = scmp.ne.s32.totalorder %s152, %s153
    %p164 = scmp.eq.s32.totalorder %s17, 0
    %p165 = por %p163, %p164
    %p166 = scmp.ne.s32.totalorder %s152, %s153
    %p167 = scmp.eq.s32.totalorder %s18, 1
    %p168 = por %p166, %p167
    %p170 = scmp.ne.s32.totalorder %s153, %s169
    %p171 = scmp.eq.s32.totalorder %s18, 0
    %p172 = por %p170, %p171
    %s173 = ssub.s32 %s19, %s38
    %p174 = scmp.eq.s32.totalorder %s173, 0
    %s176 = sadd.s32 %s175, 1
    %s177 = scalar_select %p174, %s175, %s176
    %p180 = pneg %p174
    %p181 = scmp.eq.s32.totalorder %s12, 1
    %p182 = por %p180, %p181
    %p183 = scmp.ne.s32.totalorder %s175, %s178
    %p184 = scmp.eq.s32.totalorder %s12, 0
    %p185 = por %p183, %p184
    %p186 = scmp.ne.s32.totalorder %s175, %s178
    %p187 = scmp.eq.s32.totalorder %s17, 1
    %p188 = por %p186, %p187
    %p189 = scmp.ne.s32.totalorder %s178, %s179
    %p190 = scmp.eq.s32.totalorder %s17, 0
    %p191 = por %p189, %p190
    %p192 = scmp.ne.s32.totalorder %s178, %s179
    %p193 = scmp.eq.s32.totalorder %s18, 1
    %p194 = por %p192, %p193
    %p196 = scmp.ne.s32.totalorder %s179, %s195
    %p197 = scmp.eq.s32.totalorder %s18, 0
    %p198 = por %p196, %p197
    %s199 = ssub.s32 %s20, %s34
    %s200 = ssub.s32 %s19, %s38
    %s201 = sor.u32 %s199, %s200
    %p202 = scmp.eq.s32.totalorder %s201, 0
    %s204 = sadd.s32 %s203, 1
    %s205 = scalar_select %p202, %s203, %s204
    %p208 = pneg %p202
    %p209 = scmp.eq.s32.totalorder %s12, 1
    %p210 = por %p208, %p209
    %p211 = scmp.ne.s32.totalorder %s203, %s206
    %p212 = scmp.eq.s32.totalorder %s12, 0
    %p213 = por %p211, %p212
    %p214 = scmp.ne.s32.totalorder %s203, %s206
    %p215 = scmp.eq.s32.totalorder %s17, 1
    %p216 = por %p214, %p215
    %p217 = scmp.ne.s32.totalorder %s206, %s207
    %p218 = scmp.eq.s32.totalorder %s17, 0
    %p219 = por %p217, %p218
    %p220 = scmp.ne.s32.totalorder %s206, %s207
    %p221 = scmp.eq.s32.totalorder %s18, 1
    %p222 = por %p220, %p221
    %p224 = scmp.ne.s32.totalorder %s207, %s223
    %p225 = scmp.eq.s32.totalorder %s18, 0
    %p226 = por %p224, %p225
    %p227 = scmp.le.s32.totalorder 1, %s12
    %p228 = scmp.lt.s32.totalorder %s12, 3
    %p229 = pnand %p227, %p228
    %p230 = pneg %p229
    // Predicated region
    $region9: #{fused_forward.1} parent=5 // pred_check
      _
    $region10: #{fused_forward.1} parent=5 // pred_check_branch
      %232 = sbr.rel (%p229) target = $region12
    $region11: #{fused_forward.1} parent=5 // pred_region
      %s233 = ssub.s32 %s12, 1
      // Predicated region
      $region13: #{fused_forward.1} parent=11 // pred_check
        %p234 = pneg %p113
      $region14: #{fused_forward.1} parent=11 // pred_check_branch
        %236 = sbr.rel (%p234) target = $region16
      $region15: #{fused_forward.1} parent=11 // pred_region
        %s237 = smul.u32 16, %s22
        %p238 = scmp.lt.s32.totalorder %s237, 15
        %s239 = scalar_select %p238, %s237, 15
        %s240 = smul.addr %s239, 2
        %s241 = smul.addr %s240, 4
        %s242 = scalar_lea.vmem %s2, %s241
        %s243 = smul.u32 16, %s22
      $region16: #{fused_forward.1} parent=11 // pred_fallthru
        _
      // Predicated region
      $region17: #{fused_forward.1} parent=11 // pred_check
        %p244 = pneg %p139
      $region18: #{fused_forward.1} parent=11 // pred_check_branch
        %246 = sbr.rel (%p244) target = $region20
      $region19: #{fused_forward.1} parent=11 // pred_region
        %s247 = smul.u32 32, %s24
        %p248 = scmp.lt.s32.totalorder %s247, 31
        %s249 = scalar_select %p248, %s247, 31
        %s250 = smul.addr %s249, 8
        %s251 = scalar_lea.vmem %s3, %s250
        %s252 = smul.u32 32, %s24
      $region20: #{fused_forward.1} parent=11 // pred_fallthru
        _
      // Predicated region
      $region21: #{fused_forward.1} parent=11 // pred_check
        %p253 = pneg %p165
      $region22: #{fused_forward.1} parent=11 // pred_check_branch
        %255 = sbr.rel (%p253) target = $region24
      $region23: #{fused_forward.1} parent=11 // pred_region
        %s256 = smul.u32 32, %s24
        %p257 = scmp.lt.s32.totalorder %s256, 31
        %s258 = scalar_select %p257, %s256, 31
        %s259 = smul.addr %s258, 8
        %s260 = scalar_lea.vmem %s4, %s259
        %s261 = smul.u32 32, %s24
      $region24: #{fused_forward.1} parent=11 // pred_fallthru
        _
      // Predicated region
      $region25: #{fused_forward.1} parent=11 // pred_check
        %p262 = pneg %p191
      $region26: #{fused_forward.1} parent=11 // pred_check_branch
        %264 = sbr.rel (%p262) target = $region28
      $region27: #{fused_forward.1} parent=11 // pred_region
        %s265 = smul.u32 16, %s22
        %p266 = scmp.lt.s32.totalorder %s265, 15
        %s267 = scalar_select %p266, %s265, 15
        %s268 = smul.addr %s267, 8
        %s269 = scalar_lea.vmem %s5, %s268
        %s270 = smul.u32 16, %s22
      $region28: #{fused_forward.1} parent=11 // pred_fallthru
        _
    $region12: #{fused_forward.1} parent=5 // pred_fallthru
      _
    %p271 = scmp.lt.s32.totalorder %s12, 2
    // Predicated region
    $region29: #{fused_forward.1} parent=5 // pred_check
      %p272 = pneg %p271
    $region30: #{fused_forward.1} parent=5 // pred_check_branch
      %274 = sbr.rel (%p272) target = $region32
    $region31: #{fused_forward.1} parent=5 // pred_region
      // Predicated region
      $region33: #{fused_forward.1} parent=31 // pred_check
        %p275 = pneg %p53
      $region34: #{fused_forward.1} parent=31 // pred_check_branch
        %277 = sbr.rel (%p275) target = $region36
      $region35: #{fused_forward.1} parent=31 // pred_region
        %s278 = smul.u32 32, %s21
        %p279 = scmp.lt.s32.totalorder %s20, 1
        %s280 = scalar_select %p279, %s20, 1
        %p281 = scmp.lt.s32.totalorder %s278, 31
        %s282 = scalar_select %p281, %s278, 31
        %s283 = smul.addr %s280, 32
        %s284 = sadd.s32 %s282, %s283
        %s285 = smul.addr %s284, 8
        %s286 = scalar_lea.vmem %s0, %s285
        %s287 = smul.u32 32, %s21
      $region36: #{fused_forward.1} parent=31 // pred_fallthru
        _
      // Predicated region
      $region37: #{fused_forward.1} parent=31 // pred_check
        %p288 = pneg %p81
      $region38: #{fused_forward.1} parent=31 // pred_check_branch
        %290 = sbr.rel (%p288) target = $region40
      $region39: #{fused_forward.1} parent=31 // pred_region
        %s291 = smul.u32 32, %s21
        %p292 = scmp.lt.s32.totalorder %s20, 1
        %s293 = scalar_select %p292, %s20, 1
        %p294 = scmp.lt.s32.totalorder %s291, 31
        %s295 = scalar_select %p294, %s291, 31
        %s296 = smul.addr %s293, 32
        %s297 = sadd.s32 %s295, %s296
        %s298 = smul.addr %s297, 8
        %s299 = scalar_lea.vmem %s1, %s298
        %s300 = smul.u32 32, %s21
      $region40: #{fused_forward.1} parent=31 // pred_fallthru
        _
    $region32: #{fused_forward.1} parent=5 // pred_fallthru
      _
    %p301 = scmp.le.s32.totalorder 1, %s12
    %p302 = scmp.lt.s32.totalorder %s12, 3
    %p303 = pnand %p301, %p302
    %p304 = pneg %p303
    // Predicated region
    $region41: #{fused_forward.1} parent=5 // pred_check
      _
    $region42: #{fused_forward.1} parent=5 // pred_check_branch
      %306 = sbr.rel (%p303) target = $region44
    $region43: #{fused_forward.1} parent=5 // pred_region
      %s307 = ssub.s32 %s12, 1
      %s308 = smul.u32 32, %s24
      %p309 = scmp.lt.s32.totalorder %s23, 1
      %s310 = scalar_select %p309, %s23, 1
      %p311 = scmp.lt.s32.totalorder %s308, 31
      %s312 = scalar_select %p311, %s308, 31
      %s313 = smul.addr %s310, 32
      %s314 = sadd.s32 %s312, %s313
      %s315 = smul.addr %s314, 8
      %s316 = scalar_lea.vmem %s0, %s315
      %p317 = pneg %p59
      %p318 = pneg %p56
      %s319 = smul.u32 32, %s24
      %p320 = scmp.lt.s32.totalorder %s23, 1
      %s321 = scalar_select %p320, %s23, 1
      %p322 = scmp.lt.s32.totalorder %s319, 31
      %s323 = scalar_select %p322, %s319, 31
      %s324 = smul.addr %s321, 32
      %s325 = sadd.s32 %s323, %s324
      %s326 = smul.addr %s325, 8
      %s327 = scalar_lea.vmem %s1, %s326
      %p328 = pneg %p87
      %p329 = pneg %p84
      %s330 = smul.u32 16, %s22
      %p331 = scmp.lt.s32.totalorder %s330, 15
      %s332 = scalar_select %p331, %s330, 15
      %s333 = smul.addr %s332, 2
      %s334 = smul.addr %s333, 4
      %s335 = scalar_lea.vmem %s2, %s334
      %p336 = pneg %p113
      %p337 = pneg %p110
      %s338 = smul.u32 32, %s24
      %p339 = scmp.lt.s32.totalorder %s338, 31
      %s340 = scalar_select %p339, %s338, 31
      %s341 = smul.addr %s340, 8
      %s342 = scalar_lea.vmem %s3, %s341
      %p343 = pneg %p139
      %p344 = pneg %p136
      %s345 = smul.u32 32, %s24
      %p346 = scmp.lt.s32.totalorder %s345, 31
      %s347 = scalar_select %p346, %s345, 31
      %s348 = smul.addr %s347, 8
      %s349 = scalar_lea.vmem %s4, %s348
      %p350 = pneg %p165
      %p351 = pneg %p162
      %s352 = smul.u32 16, %s22
      %p353 = scmp.lt.s32.totalorder %s352, 15
      %s354 = scalar_select %p353, %s352, 15
      %s355 = smul.addr %s354, 8
      %s356 = scalar_lea.vmem %s5, %s355
      %p357 = pneg %p191
      %p358 = pneg %p188
      %p359 = pneg %p219
      %p360 = pneg %p216
      %s361 = smul.u32 16, %s22
      %p362 = scmp.lt.s32.totalorder %s23, 1
      %s363 = scalar_select %p362, %s23, 1
      %p364 = scmp.lt.s32.totalorder %s361, 15
      %s365 = scalar_select %p364, %s361, 15
      %s366 = smul.addr %s363, 16
      %s367 = sadd.s32 %s365, %s366
      %s368 = smul.addr %s367, 8
      %s369 = scalar_lea.vmem %s6, %s368
      %s370 = smul.u32 32, %s24
      %p371 = scmp.lt.s32.totalorder %s23, 1
      %s372 = scalar_select %p371, %s23, 1
      %p373 = scmp.lt.s32.totalorder %s370, 31
      %s374 = scalar_select %p373, %s370, 31
      %s375 = smul.addr %s372, 32
      %s376 = sadd.s32 %s374, %s375
      %s377 = smul.addr %s376, 8
      %s378 = scalar_lea.vmem %s0, %s377
      %s379 = smul.u32 32, %s24
      %s380 = smul.u32 32, %s24
      %p381 = scmp.lt.s32.totalorder %s23, 1
      %s382 = scalar_select %p381, %s23, 1
      %p383 = scmp.lt.s32.totalorder %s380, 31
      %s384 = scalar_select %p383, %s380, 31
      %s385 = smul.addr %s382, 32
      %s386 = sadd.s32 %s384, %s385
      %s387 = smul.addr %s386, 8
      %s388 = scalar_lea.vmem %s1, %s387
      %s389 = smul.u32 32, %s24
      %s390 = smul.u32 16, %s22
      %p391 = scmp.lt.s32.totalorder %s390, 15
      %s392 = scalar_select %p391, %s390, 15
      %s393 = smul.addr %s392, 2
      %s394 = smul.addr %s393, 4
      %s395 = scalar_lea.vmem %s2, %s394
      %s396 = smul.u32 16, %s22
      %s397 = smul.u32 32, %s24
      %p398 = scmp.lt.s32.totalorder %s397, 31
      %s399 = scalar_select %p398, %s397, 31
      %s400 = smul.addr %s399, 8
      %s401 = scalar_lea.vmem %s3, %s400
      %s402 = smul.u32 32, %s24
      %s403 = smul.u32 32, %s24
      %p404 = scmp.lt.s32.totalorder %s403, 31
      %s405 = scalar_select %p404, %s403, 31
      %s406 = smul.addr %s405, 8
      %s407 = scalar_lea.vmem %s4, %s406
      %s408 = smul.u32 32, %s24
      %s409 = smul.u32 16, %s22
      %p410 = scmp.lt.s32.totalorder %s409, 15
      %s411 = scalar_select %p410, %s409, 15
      %s412 = smul.addr %s411, 8
      %s413 = scalar_lea.vmem %s5, %s412
      %s414 = smul.u32 16, %s22
      %s415 = smul.u32 16, %s22
      %p416 = scmp.lt.s32.totalorder %s23, 1
      %s417 = scalar_select %p416, %s23, 1
      %p418 = scmp.lt.s32.totalorder %s415, 15
      %s419 = scalar_select %p418, %s415, 15
      %s420 = smul.addr %s417, 16
      %s421 = sadd.s32 %s419, %s420
      %s422 = smul.addr %s421, 8
      %s423 = scalar_lea.vmem %s6, %s422
      %s424 = smul.u32 16, %s22
      %v426 = vld [vmem:[%s378] sm:$0xff]
      %v427 = vld [vmem:[%s378 + $0x8] sm:$0xff]
      %v428 = vld [vmem:[%s378 + $0x10] sm:$0xff]
      %v429 = vld [vmem:[%s378 + $0x18] sm:$0xff]
      %v430 = vld [vmem:[%s378 + $0x20] sm:$0xff]
      %v431 = vld [vmem:[%s378 + $0x28] sm:$0xff]
      %v432 = vld [vmem:[%s378 + $0x30] sm:$0xff]
      %v433 = vld [vmem:[%s378 + $0x38] sm:$0xff]
      %v434 = vld [vmem:[%s378 + $0x40] sm:$0xff]
      %v435 = vld [vmem:[%s378 + $0x48] sm:$0xff]
      %v436 = vld [vmem:[%s378 + $0x50] sm:$0xff]
      %v437 = vld [vmem:[%s378 + $0x58] sm:$0xff]
      %v438 = vld [vmem:[%s378 + $0x60] sm:$0xff]
      %v439 = vld [vmem:[%s378 + $0x68] sm:$0xff]
      %v440 = vld [vmem:[%s378 + $0x70] sm:$0xff]
      %v441 = vld [vmem:[%s378 + $0x78] sm:$0xff]
      %v442 = vld [vmem:[%s378 + $0x80] sm:$0xff]
      %v443 = vld [vmem:[%s378 + $0x88] sm:$0xff]
      %v444 = vld [vmem:[%s378 + $0x90] sm:$0xff]
      %v445 = vld [vmem:[%s378 + $0x98] sm:$0xff]
      %v446 = vld [vmem:[%s378 + $0xa0] sm:$0xff]
      %v447 = vld [vmem:[%s378 + $0xa8] sm:$0xff]
      %v448 = vld [vmem:[%s378 + $0xb0] sm:$0xff]
      %v449 = vld [vmem:[%s378 + $0xb8] sm:$0xff]
      %v450 = vld [vmem:[%s378 + $0xc0] sm:$0xff]
      %v451 = vld [vmem:[%s378 + $0xc8] sm:$0xff]
      %v452 = vld [vmem:[%s378 + $0xd0] sm:$0xff]
      %v453 = vld [vmem:[%s378 + $0xd8] sm:$0xff]
      %v454 = vld [vmem:[%s378 + $0xe0] sm:$0xff]
      %v455 = vld [vmem:[%s378 + $0xe8] sm:$0xff]
      %v456 = vld [vmem:[%s378 + $0xf0] sm:$0xff]
      %v457 = vld [vmem:[%s378 + $0xf8] sm:$0xff]
      %v458 = vld [vmem:[%s401] sm:$0xff]
      %v459 = vld [vmem:[%s401 + $0x8] sm:$0xff]
      %v460 = vld [vmem:[%s401 + $0x10] sm:$0xff]
      %v461 = vld [vmem:[%s401 + $0x18] sm:$0xff]
      %v462 = vld [vmem:[%s401 + $0x20] sm:$0xff]
      %v463 = vld [vmem:[%s401 + $0x28] sm:$0xff]
      %v464 = vld [vmem:[%s401 + $0x30] sm:$0xff]
      %v465 = vld [vmem:[%s401 + $0x38] sm:$0xff]
      %v466 = vld [vmem:[%s401 + $0x40] sm:$0xff]
      %v467 = vld [vmem:[%s401 + $0x48] sm:$0xff]
      %v468 = vld [vmem:[%s401 + $0x50] sm:$0xff]
      %v469 = vld [vmem:[%s401 + $0x58] sm:$0xff]
      %v470 = vld [vmem:[%s401 + $0x60] sm:$0xff]
      %v471 = vld [vmem:[%s401 + $0x68] sm:$0xff]
      %v472 = vld [vmem:[%s401 + $0x70] sm:$0xff]
      %v473 = vld [vmem:[%s401 + $0x78] sm:$0xff]
      %v474 = vld [vmem:[%s401 + $0x80] sm:$0xff]
      %v475 = vld [vmem:[%s401 + $0x88] sm:$0xff]
      %v476 = vld [vmem:[%s401 + $0x90] sm:$0xff]
      %v477 = vld [vmem:[%s401 + $0x98] sm:$0xff]
      %v478 = vld [vmem:[%s401 + $0xa0] sm:$0xff]
      %v479 = vld [vmem:[%s401 + $0xa8] sm:$0xff]
      %v480 = vld [vmem:[%s401 + $0xb0] sm:$0xff]
      %v481 = vld [vmem:[%s401 + $0xb8] sm:$0xff]
      %v482 = vld [vmem:[%s401 + $0xc0] sm:$0xff]
      %v483 = vld [vmem:[%s401 + $0xc8] sm:$0xff]
      %v484 = vld [vmem:[%s401 + $0xd0] sm:$0xff]
      %v485 = vld [vmem:[%s401 + $0xd8] sm:$0xff]
      %v486 = vld [vmem:[%s401 + $0xe0] sm:$0xff]
      %v487 = vld [vmem:[%s401 + $0xe8] sm:$0xff]
      %v488 = vld [vmem:[%s401 + $0xf0] sm:$0xff]
      %v489 = vld [vmem:[%s401 + $0xf8] sm:$0xff]
      %491 = vset.pattern.permute.xlu0 0
      %492 = vperm.xlu0 %491, %v458
      %v493 = vpop.permute.xlu0 %492
      %496 = vset.pattern.permute.xlu0 0
      %497 = vperm.xlu0 %496, %v459
      %v498 = vpop.permute.xlu0 %497
      %501 = vset.pattern.permute.xlu0 0
      %502 = vperm.xlu0 %501, %v460
      %v503 = vpop.permute.xlu0 %502
      %506 = vset.pattern.permute.xlu0 0
      %507 = vperm.xlu0 %506, %v461
      %v508 = vpop.permute.xlu0 %507
      %511 = vset.pattern.permute.xlu0 0
      %512 = vperm.xlu0 %511, %v462
      %v513 = vpop.permute.xlu0 %512
      %516 = vset.pattern.permute.xlu0 0
      %517 = vperm.xlu0 %516, %v463
      %v518 = vpop.permute.xlu0 %517
      %521 = vset.pattern.permute.xlu0 0
      %522 = vperm.xlu0 %521, %v464
      %v523 = vpop.permute.xlu0 %522
      %526 = vset.pattern.permute.xlu0 0
      %527 = vperm.xlu0 %526, %v465
      %v528 = vpop.permute.xlu0 %527
      %531 = vset.pattern.permute.xlu0 0
      %532 = vperm.xlu0 %531, %v466
      %v533 = vpop.permute.xlu0 %532
      %536 = vset.pattern.permute.xlu0 0
      %537 = vperm.xlu0 %536, %v467
      %v538 = vpop.permute.xlu0 %537
      %541 = vset.pattern.permute.xlu0 0
      %542 = vperm.xlu0 %541, %v468
      %v543 = vpop.permute.xlu0 %542
      %546 = vset.pattern.permute.xlu0 0
      %547 = vperm.xlu0 %546, %v469
      %v548 = vpop.permute.xlu0 %547
      %551 = vset.pattern.permute.xlu0 0
      %552 = vperm.xlu0 %551, %v470
      %v553 = vpop.permute.xlu0 %552
      %556 = vset.pattern.permute.xlu0 0
      %557 = vperm.xlu0 %556, %v471
      %v558 = vpop.permute.xlu0 %557
      %561 = vset.pattern.permute.xlu0 0
      %562 = vperm.xlu0 %561, %v472
      %v563 = vpop.permute.xlu0 %562
      %566 = vset.pattern.permute.xlu0 0
      %567 = vperm.xlu0 %566, %v473
      %v568 = vpop.permute.xlu0 %567
      %571 = vset.pattern.permute.xlu0 0
      %572 = vperm.xlu0 %571, %v474
      %v573 = vpop.permute.xlu0 %572
      %576 = vset.pattern.permute.xlu0 0
      %577 = vperm.xlu0 %576, %v475
      %v578 = vpop.permute.xlu0 %577
      %581 = vset.pattern.permute.xlu0 0
      %582 = vperm.xlu0 %581, %v476
      %v583 = vpop.permute.xlu0 %582
      %586 = vset.pattern.permute.xlu0 0
      %587 = vperm.xlu0 %586, %v477
      %v588 = vpop.permute.xlu0 %587
      %591 = vset.pattern.permute.xlu0 0
      %592 = vperm.xlu0 %591, %v478
      %v593 = vpop.permute.xlu0 %592
      %596 = vset.pattern.permute.xlu0 0
      %597 = vperm.xlu0 %596, %v479
      %v598 = vpop.permute.xlu0 %597
      %601 = vset.pattern.permute.xlu0 0
      %602 = vperm.xlu0 %601, %v480
      %v603 = vpop.permute.xlu0 %602
      %606 = vset.pattern.permute.xlu0 0
      %607 = vperm.xlu0 %606, %v481
      %v608 = vpop.permute.xlu0 %607
      %611 = vset.pattern.permute.xlu0 0
      %612 = vperm.xlu0 %611, %v482
      %v613 = vpop.permute.xlu0 %612
      %616 = vset.pattern.permute.xlu0 0
      %617 = vperm.xlu0 %616, %v483
      %v618 = vpop.permute.xlu0 %617
      %621 = vset.pattern.permute.xlu0 0
      %622 = vperm.xlu0 %621, %v484
      %v623 = vpop.permute.xlu0 %622
      %626 = vset.pattern.permute.xlu0 0
      %627 = vperm.xlu0 %626, %v485
      %v628 = vpop.permute.xlu0 %627
      %631 = vset.pattern.permute.xlu0 0
      %632 = vperm.xlu0 %631, %v486
      %v633 = vpop.permute.xlu0 %632
      %636 = vset.pattern.permute.xlu0 0
      %637 = vperm.xlu0 %636, %v487
      %v638 = vpop.permute.xlu0 %637
      %641 = vset.pattern.permute.xlu0 0
      %642 = vperm.xlu0 %641, %v488
      %v643 = vpop.permute.xlu0 %642
      %646 = vset.pattern.permute.xlu0 0
      %647 = vperm.xlu0 %646, %v489
      %v648 = vpop.permute.xlu0 %647
      %v650 = vmul.f32 %v426, %v493
      %v651 = vmul.f32 %v427, %v498
      %v652 = vmul.f32 %v428, %v503
      %v653 = vmul.f32 %v429, %v508
      %v654 = vmul.f32 %v430, %v513
      %v655 = vmul.f32 %v431, %v518
      %v656 = vmul.f32 %v432, %v523
      %v657 = vmul.f32 %v433, %v528
      %v658 = vmul.f32 %v434, %v533
      %v659 = vmul.f32 %v435, %v538
      %v660 = vmul.f32 %v436, %v543
      %v661 = vmul.f32 %v437, %v548
      %v662 = vmul.f32 %v438, %v553
      %v663 = vmul.f32 %v439, %v558
      %v664 = vmul.f32 %v440, %v563
      %v665 = vmul.f32 %v441, %v568
      %v666 = vmul.f32 %v442, %v573
      %v667 = vmul.f32 %v443, %v578
      %v668 = vmul.f32 %v444, %v583
      %v669 = vmul.f32 %v445, %v588
      %v670 = vmul.f32 %v446, %v593
      %v671 = vmul.f32 %v447, %v598
      %v672 = vmul.f32 %v448, %v603
      %v673 = vmul.f32 %v449, %v608
      %v674 = vmul.f32 %v450, %v613
      %v675 = vmul.f32 %v451, %v618
      %v676 = vmul.f32 %v452, %v623
      %v677 = vmul.f32 %v453, %v628
      %v678 = vmul.f32 %v454, %v633
      %v679 = vmul.f32 %v455, %v638
      %v680 = vmul.f32 %v456, %v643
      %v681 = vmul.f32 %v457, %v648
      %v682 = vld [vmem:[%s407] sm:$0xff]
      %v683 = vld [vmem:[%s407 + $0x8] sm:$0xff]
      %v684 = vld [vmem:[%s407 + $0x10] sm:$0xff]
      %v685 = vld [vmem:[%s407 + $0x18] sm:$0xff]
      %v686 = vld [vmem:[%s407 + $0x20] sm:$0xff]
      %v687 = vld [vmem:[%s407 + $0x28] sm:$0xff]
      %v688 = vld [vmem:[%s407 + $0x30] sm:$0xff]
      %v689 = vld [vmem:[%s407 + $0x38] sm:$0xff]
      %v690 = vld [vmem:[%s407 + $0x40] sm:$0xff]
      %v691 = vld [vmem:[%s407 + $0x48] sm:$0xff]
      %v692 = vld [vmem:[%s407 + $0x50] sm:$0xff]
      %v693 = vld [vmem:[%s407 + $0x58] sm:$0xff]
      %v694 = vld [vmem:[%s407 + $0x60] sm:$0xff]
      %v695 = vld [vmem:[%s407 + $0x68] sm:$0xff]
      %v696 = vld [vmem:[%s407 + $0x70] sm:$0xff]
      %v697 = vld [vmem:[%s407 + $0x78] sm:$0xff]
      %v698 = vld [vmem:[%s407 + $0x80] sm:$0xff]
      %v699 = vld [vmem:[%s407 + $0x88] sm:$0xff]
      %v700 = vld [vmem:[%s407 + $0x90] sm:$0xff]
      %v701 = vld [vmem:[%s407 + $0x98] sm:$0xff]
      %v702 = vld [vmem:[%s407 + $0xa0] sm:$0xff]
      %v703 = vld [vmem:[%s407 + $0xa8] sm:$0xff]
      %v704 = vld [vmem:[%s407 + $0xb0] sm:$0xff]
      %v705 = vld [vmem:[%s407 + $0xb8] sm:$0xff]
      %v706 = vld [vmem:[%s407 + $0xc0] sm:$0xff]
      %v707 = vld [vmem:[%s407 + $0xc8] sm:$0xff]
      %v708 = vld [vmem:[%s407 + $0xd0] sm:$0xff]
      %v709 = vld [vmem:[%s407 + $0xd8] sm:$0xff]
      %v710 = vld [vmem:[%s407 + $0xe0] sm:$0xff]
      %v711 = vld [vmem:[%s407 + $0xe8] sm:$0xff]
      %v712 = vld [vmem:[%s407 + $0xf0] sm:$0xff]
      %v713 = vld [vmem:[%s407 + $0xf8] sm:$0xff]
      %715 = vset.pattern.permute.xlu0 0
      %716 = vperm.xlu0 %715, %v682
      %v717 = vpop.permute.xlu0 %716
      %720 = vset.pattern.permute.xlu0 0
      %721 = vperm.xlu0 %720, %v683
      %v722 = vpop.permute.xlu0 %721
      %725 = vset.pattern.permute.xlu0 0
      %726 = vperm.xlu0 %725, %v684
      %v727 = vpop.permute.xlu0 %726
      %730 = vset.pattern.permute.xlu0 0
      %731 = vperm.xlu0 %730, %v685
      %v732 = vpop.permute.xlu0 %731
      %735 = vset.pattern.permute.xlu0 0
      %736 = vperm.xlu0 %735, %v686
      %v737 = vpop.permute.xlu0 %736
      %740 = vset.pattern.permute.xlu0 0
      %741 = vperm.xlu0 %740, %v687
      %v742 = vpop.permute.xlu0 %741
      %745 = vset.pattern.permute.xlu0 0
      %746 = vperm.xlu0 %745, %v688
      %v747 = vpop.permute.xlu0 %746
      %750 = vset.pattern.permute.xlu0 0
      %751 = vperm.xlu0 %750, %v689
      %v752 = vpop.permute.xlu0 %751
      %755 = vset.pattern.permute.xlu0 0
      %756 = vperm.xlu0 %755, %v690
      %v757 = vpop.permute.xlu0 %756
      %760 = vset.pattern.permute.xlu0 0
      %761 = vperm.xlu0 %760, %v691
      %v762 = vpop.permute.xlu0 %761
      %765 = vset.pattern.permute.xlu0 0
      %766 = vperm.xlu0 %765, %v692
      %v767 = vpop.permute.xlu0 %766
      %770 = vset.pattern.permute.xlu0 0
      %771 = vperm.xlu0 %770, %v693
      %v772 = vpop.permute.xlu0 %771
      %775 = vset.pattern.permute.xlu0 0
      %776 = vperm.xlu0 %775, %v694
      %v777 = vpop.permute.xlu0 %776
      %780 = vset.pattern.permute.xlu0 0
      %781 = vperm.xlu0 %780, %v695
      %v782 = vpop.permute.xlu0 %781
      %785 = vset.pattern.permute.xlu0 0
      %786 = vperm.xlu0 %785, %v696
      %v787 = vpop.permute.xlu0 %786
      %790 = vset.pattern.permute.xlu0 0
      %791 = vperm.xlu0 %790, %v697
      %v792 = vpop.permute.xlu0 %791
      %795 = vset.pattern.permute.xlu0 0
      %796 = vperm.xlu0 %795, %v698
      %v797 = vpop.permute.xlu0 %796
      %800 = vset.pattern.permute.xlu0 0
      %801 = vperm.xlu0 %800, %v699
      %v802 = vpop.permute.xlu0 %801
      %805 = vset.pattern.permute.xlu0 0
      %806 = vperm.xlu0 %805, %v700
      %v807 = vpop.permute.xlu0 %806
      %810 = vset.pattern.permute.xlu0 0
      %811 = vperm.xlu0 %810, %v701
      %v812 = vpop.permute.xlu0 %811
      %815 = vset.pattern.permute.xlu0 0
      %816 = vperm.xlu0 %815, %v702
      %v817 = vpop.permute.xlu0 %816
      %820 = vset.pattern.permute.xlu0 0
      %821 = vperm.xlu0 %820, %v703
      %v822 = vpop.permute.xlu0 %821
      %825 = vset.pattern.permute.xlu0 0
      %826 = vperm.xlu0 %825, %v704
      %v827 = vpop.permute.xlu0 %826
      %830 = vset.pattern.permute.xlu0 0
      %831 = vperm.xlu0 %830, %v705
      %v832 = vpop.permute.xlu0 %831
      %835 = vset.pattern.permute.xlu0 0
      %836 = vperm.xlu0 %835, %v706
      %v837 = vpop.permute.xlu0 %836
      %840 = vset.pattern.permute.xlu0 0
      %841 = vperm.xlu0 %840, %v707
      %v842 = vpop.permute.xlu0 %841
      %845 = vset.pattern.permute.xlu0 0
      %846 = vperm.xlu0 %845, %v708
      %v847 = vpop.permute.xlu0 %846
      %850 = vset.pattern.permute.xlu0 0
      %851 = vperm.xlu0 %850, %v709
      %v852 = vpop.permute.xlu0 %851
      %855 = vset.pattern.permute.xlu0 0
      %856 = vperm.xlu0 %855, %v710
      %v857 = vpop.permute.xlu0 %856
      %860 = vset.pattern.permute.xlu0 0
      %861 = vperm.xlu0 %860, %v711
      %v862 = vpop.permute.xlu0 %861
      %865 = vset.pattern.permute.xlu0 0
      %866 = vperm.xlu0 %865, %v712
      %v867 = vpop.permute.xlu0 %866
      %870 = vset.pattern.permute.xlu0 0
      %871 = vperm.xlu0 %870, %v713
      %v872 = vpop.permute.xlu0 %871
      %v874 = vadd.f32 %v650, %v717
      %v875 = vadd.f32 %v651, %v722
      %v876 = vadd.f32 %v652, %v727
      %v877 = vadd.f32 %v653, %v732
      %v878 = vadd.f32 %v654, %v737
      %v879 = vadd.f32 %v655, %v742
      %v880 = vadd.f32 %v656, %v747
      %v881 = vadd.f32 %v657, %v752
      %v882 = vadd.f32 %v658, %v757
      %v883 = vadd.f32 %v659, %v762
      %v884 = vadd.f32 %v660, %v767
      %v885 = vadd.f32 %v661, %v772
      %v886 = vadd.f32 %v662, %v777
      %v887 = vadd.f32 %v663, %v782
      %v888 = vadd.f32 %v664, %v787
      %v889 = vadd.f32 %v665, %v792
      %v890 = vadd.f32 %v666, %v797
      %v891 = vadd.f32 %v667, %v802
      %v892 = vadd.f32 %v668, %v807
      %v893 = vadd.f32 %v669, %v812
      %v894 = vadd.f32 %v670, %v817
      %v895 = vadd.f32 %v671, %v822
      %v896 = vadd.f32 %v672, %v827
      %v897 = vadd.f32 %v673, %v832
      %v898 = vadd.f32 %v674, %v837
      %v899 = vadd.f32 %v675, %v842
      %v900 = vadd.f32 %v676, %v847
      %v901 = vadd.f32 %v677, %v852
      %v902 = vadd.f32 %v678, %v857
      %v903 = vadd.f32 %v679, %v862
      %v904 = vadd.f32 %v680, %v867
      %v905 = vadd.f32 %v681, %v872
      %v906 = vld [vmem:[%s388] sm:$0xff]
      %v907 = vld [vmem:[%s388 + $0x8] sm:$0xff]
      %v908 = vld [vmem:[%s388 + $0x10] sm:$0xff]
      %v909 = vld [vmem:[%s388 + $0x18] sm:$0xff]
      %v910 = vld [vmem:[%s388 + $0x20] sm:$0xff]
      %v911 = vld [vmem:[%s388 + $0x28] sm:$0xff]
      %v912 = vld [vmem:[%s388 + $0x30] sm:$0xff]
      %v913 = vld [vmem:[%s388 + $0x38] sm:$0xff]
      %v914 = vld [vmem:[%s388 + $0x40] sm:$0xff]
      %v915 = vld [vmem:[%s388 + $0x48] sm:$0xff]
      %v916 = vld [vmem:[%s388 + $0x50] sm:$0xff]
      %v917 = vld [vmem:[%s388 + $0x58] sm:$0xff]
      %v918 = vld [vmem:[%s388 + $0x60] sm:$0xff]
      %v919 = vld [vmem:[%s388 + $0x68] sm:$0xff]
      %v920 = vld [vmem:[%s388 + $0x70] sm:$0xff]
      %v921 = vld [vmem:[%s388 + $0x78] sm:$0xff]
      %v922 = vld [vmem:[%s388 + $0x80] sm:$0xff]
      %v923 = vld [vmem:[%s388 + $0x88] sm:$0xff]
      %v924 = vld [vmem:[%s388 + $0x90] sm:$0xff]
      %v925 = vld [vmem:[%s388 + $0x98] sm:$0xff]
      %v926 = vld [vmem:[%s388 + $0xa0] sm:$0xff]
      %v927 = vld [vmem:[%s388 + $0xa8] sm:$0xff]
      %v928 = vld [vmem:[%s388 + $0xb0] sm:$0xff]
      %v929 = vld [vmem:[%s388 + $0xb8] sm:$0xff]
      %v930 = vld [vmem:[%s388 + $0xc0] sm:$0xff]
      %v931 = vld [vmem:[%s388 + $0xc8] sm:$0xff]
      %v932 = vld [vmem:[%s388 + $0xd0] sm:$0xff]
      %v933 = vld [vmem:[%s388 + $0xd8] sm:$0xff]
      %v934 = vld [vmem:[%s388 + $0xe0] sm:$0xff]
      %v935 = vld [vmem:[%s388 + $0xe8] sm:$0xff]
      %v936 = vld [vmem:[%s388 + $0xf0] sm:$0xff]
      %v937 = vld [vmem:[%s388 + $0xf8] sm:$0xff]
      %v938 = vadd.f32 %v874, %v906
      %v939 = vadd.f32 %v875, %v907
      %v940 = vadd.f32 %v876, %v908
      %v941 = vadd.f32 %v877, %v909
      %v942 = vadd.f32 %v878, %v910
      %v943 = vadd.f32 %v879, %v911
      %v944 = vadd.f32 %v880, %v912
      %v945 = vadd.f32 %v881, %v913
      %v946 = vadd.f32 %v882, %v914
      %v947 = vadd.f32 %v883, %v915
      %v948 = vadd.f32 %v884, %v916
      %v949 = vadd.f32 %v885, %v917
      %v950 = vadd.f32 %v886, %v918
      %v951 = vadd.f32 %v887, %v919
      %v952 = vadd.f32 %v888, %v920
      %v953 = vadd.f32 %v889, %v921
      %v954 = vadd.f32 %v890, %v922
      %v955 = vadd.f32 %v891, %v923
      %v956 = vadd.f32 %v892, %v924
      %v957 = vadd.f32 %v893, %v925
      %v958 = vadd.f32 %v894, %v926
      %v959 = vadd.f32 %v895, %v927
      %v960 = vadd.f32 %v896, %v928
      %v961 = vadd.f32 %v897, %v929
      %v962 = vadd.f32 %v898, %v930
      %v963 = vadd.f32 %v899, %v931
      %v964 = vadd.f32 %v900, %v932
      %v965 = vadd.f32 %v901, %v933
      %v966 = vadd.f32 %v902, %v934
      %v967 = vadd.f32 %v903, %v935
      %v968 = vadd.f32 %v904, %v936
      %v969 = vadd.f32 %v905, %v937
      %v970 = vmax.f32 %v938, 0.0
      %v971 = vmax.f32 %v939, 0.0
      %v972 = vmax.f32 %v940, 0.0
      %v973 = vmax.f32 %v941, 0.0
      %v974 = vmax.f32 %v942, 0.0
      %v975 = vmax.f32 %v943, 0.0
      %v976 = vmax.f32 %v944, 0.0
      %v977 = vmax.f32 %v945, 0.0
      %v978 = vmax.f32 %v946, 0.0
      %v979 = vmax.f32 %v947, 0.0
      %v980 = vmax.f32 %v948, 0.0
      %v981 = vmax.f32 %v949, 0.0
      %v982 = vmax.f32 %v950, 0.0
      %v983 = vmax.f32 %v951, 0.0
      %v984 = vmax.f32 %v952, 0.0
      %v985 = vmax.f32 %v953, 0.0
      %v986 = vmax.f32 %v954, 0.0
      %v987 = vmax.f32 %v955, 0.0
      %v988 = vmax.f32 %v956, 0.0
      %v989 = vmax.f32 %v957, 0.0
      %v990 = vmax.f32 %v958, 0.0
      %v991 = vmax.f32 %v959, 0.0
      %v992 = vmax.f32 %v960, 0.0
      %v993 = vmax.f32 %v961, 0.0
      %v994 = vmax.f32 %v962, 0.0
      %v995 = vmax.f32 %v963, 0.0
      %v996 = vmax.f32 %v964, 0.0
      %v997 = vmax.f32 %v965, 0.0
      %v998 = vmax.f32 %v966, 0.0
      %v999 = vmax.f32 %v967, 0.0
      %v1000 = vmax.f32 %v968, 0.0
      %v1001 = vmax.f32 %v969, 0.0
      %s1002 = smul.u32 %s24, 32
      %s1003 = smul.addr %s1002, 4
      %s1004 = scalar_lea.vmem %s395, %s1003
      %v1005 = vld [vmem:[%s1004] sm:$0xff]
      %v1006 = vld [vmem:[%s1004 + $0x8] sm:$0xff]
      %v1007 = vld [vmem:[%s1004 + $0x10] sm:$0xff]
      %v1008 = vld [vmem:[%s1004 + $0x18] sm:$0xff]
      %v1009 = vld [vmem:[%s1004 + $0x20] sm:$0xff]
      %v1010 = vld [vmem:[%s1004 + $0x28] sm:$0xff]
      %v1011 = vld [vmem:[%s1004 + $0x30] sm:$0xff]
      %v1012 = vld [vmem:[%s1004 + $0x38] sm:$0xff]
      %v1013 = vld [vmem:[%s1004 + $0x40] sm:$0xff]
      %v1014 = vld [vmem:[%s1004 + $0x48] sm:$0xff]
      %v1015 = vld [vmem:[%s1004 + $0x50] sm:$0xff]
      %v1016 = vld [vmem:[%s1004 + $0x58] sm:$0xff]
      %v1017 = vld [vmem:[%s1004 + $0x60] sm:$0xff]
      %v1018 = vld [vmem:[%s1004 + $0x68] sm:$0xff]
      %v1019 = vld [vmem:[%s1004 + $0x70] sm:$0xff]
      %v1020 = vld [vmem:[%s1004 + $0x78] sm:$0xff]
      %v1021 = vpack.c.bf16 %v971, %v970
      %v1022 = vpack.c.bf16 %v973, %v972
      %v1023 = vpack.c.bf16 %v975, %v974
      %v1024 = vpack.c.bf16 %v977, %v976
      %v1025 = vpack.c.bf16 %v979, %v978
      %v1026 = vpack.c.bf16 %v981, %v980
      %v1027 = vpack.c.bf16 %v983, %v982
      %v1028 = vpack.c.bf16 %v985, %v984
      %v1029 = vpack.c.bf16 %v987, %v986
      %v1030 = vpack.c.bf16 %v989, %v988
      %v1031 = vpack.c.bf16 %v991, %v990
      %v1032 = vpack.c.bf16 %v993, %v992
      %v1033 = vpack.c.bf16 %v995, %v994
      %v1034 = vpack.c.bf16 %v997, %v996
      %v1035 = vpack.c.bf16 %v999, %v998
      %v1036 = vpack.c.bf16 %v1001, %v1000
      %v1053 = vunpack.c.l.b16 %v1005
      %v1054 = vunpack.c.h.b16 %v1005
      %v1055 = vunpack.c.l.b16 %v1006
      %v1056 = vunpack.c.h.b16 %v1006
      %v1057 = vunpack.c.l.b16 %v1007
      %v1058 = vunpack.c.h.b16 %v1007
      %v1059 = vunpack.c.l.b16 %v1008
      %v1060 = vunpack.c.h.b16 %v1008
      %v1061 = vunpack.c.l.b16 %v1009
      %v1062 = vunpack.c.h.b16 %v1009
      %v1063 = vunpack.c.l.b16 %v1010
      %v1064 = vunpack.c.h.b16 %v1010
      %v1065 = vunpack.c.l.b16 %v1011
      %v1066 = vunpack.c.h.b16 %v1011
      %v1067 = vunpack.c.l.b16 %v1012
      %v1068 = vunpack.c.h.b16 %v1012
      %v1069 = vunpack.c.l.b16 %v1013
      %v1070 = vunpack.c.h.b16 %v1013
      %v1071 = vunpack.c.l.b16 %v1014
      %v1072 = vunpack.c.h.b16 %v1014
      %v1073 = vunpack.c.l.b16 %v1015
      %v1074 = vunpack.c.h.b16 %v1015
      %v1075 = vunpack.c.l.b16 %v1016
      %v1076 = vunpack.c.h.b16 %v1016
      %v1077 = vunpack.c.l.b16 %v1017
      %v1078 = vunpack.c.h.b16 %v1017
      %v1079 = vunpack.c.l.b16 %v1018
      %v1080 = vunpack.c.h.b16 %v1018
      %v1081 = vunpack.c.l.b16 %v1019
      %v1082 = vunpack.c.h.b16 %v1019
      %v1083 = vunpack.c.l.b16 %v1020
      %v1084 = vunpack.c.h.b16 %v1020
      %v1085 = vpack.c.b16 %v1055, %v1053
      %v1086 = vpack.c.b16 %v1056, %v1054
      %v1087 = vpack.c.b16 %v1059, %v1057
      %v1088 = vpack.c.b16 %v1060, %v1058
      %v1089 = vpack.c.b16 %v1063, %v1061
      %v1090 = vpack.c.b16 %v1064, %v1062
      %v1091 = vpack.c.b16 %v1067, %v1065
      %v1092 = vpack.c.b16 %v1068, %v1066
      %v1093 = vpack.c.b16 %v1071, %v1069
      %v1094 = vpack.c.b16 %v1072, %v1070
      %v1095 = vpack.c.b16 %v1075, %v1073
      %v1096 = vpack.c.b16 %v1076, %v1074
      %v1097 = vpack.c.b16 %v1079, %v1077
      %v1098 = vpack.c.b16 %v1080, %v1078
      %v1099 = vpack.c.b16 %v1083, %v1081
      %v1100 = vpack.c.b16 %v1084, %v1082
      %1117 = vmatprep.subr.bf16.mxu0 0
      %1118 = vmatpush1.bf16.msra.mxu0 %v1028
      %1119 = vmatprep.subr.bf16.mxu0 0
      %1120 = vmatpush1.bf16.msra.mxu0 %v1027
      %1121 = vmatprep.subr.bf16.mxu0 0
      %1122 = vmatpush1.bf16.msra.mxu0 %v1026
      %1123 = vmatprep.subr.bf16.mxu0 0
      %1124 = vmatpush1.bf16.msra.mxu0 %v1025
      %1125 = vmatprep.subr.bf16.mxu0 0
      %1126 = vmatpush1.bf16.msra.mxu0 %v1024
      %1127 = vmatprep.subr.bf16.mxu0 0
      %1128 = vmatpush1.bf16.msra.mxu0 %v1023
      %1129 = vmatprep.subr.bf16.mxu0 0
      %1130 = vmatpush1.bf16.msra.mxu0 %v1022
      %1131 = vmatprep.subr.bf16.mxu0 0
      %1132 = vmatpush1.bf16.msra.mxu0 %v1021
      %1133 = vmatprep.subr.bf16.mxu0 0
      %1134 = vmatpush2.bf16.msra.mxu0 %v1036
      %1135 = vmatprep.subr.bf16.mxu0 0
      %1136 = vmatpush2.bf16.msra.mxu0 %v1035
      %1137 = vmatprep.subr.bf16.mxu0 0
      %1138 = vmatpush2.bf16.msra.mxu0 %v1034
      %1139 = vmatprep.subr.bf16.mxu0 0
      %1140 = vmatpush2.bf16.msra.mxu0 %v1033
      %1141 = vmatprep.subr.bf16.mxu0 0
      %1142 = vmatpush2.bf16.msra.mxu0 %v1032
      %1143 = vmatprep.subr.bf16.mxu0 0
      %1144 = vmatpush2.bf16.msra.mxu0 %v1031
      %1145 = vmatprep.subr.bf16.mxu0 0
      %1146 = vmatpush2.bf16.msra.mxu0 %v1030
      %1147 = vmatprep.subr.bf16.mxu0 0
      %1148 = vmatpush2.bf16.msra.mxu0 %v1029
      %1149 = vmatprep.mubr.bf16.mxu0 %v1086
      %1150 = vmatmul.mubr.bf16.gmra.mxu0 %v1085
      %v1151 = vpop.f32.mrf.mxu0
      %v1152 = vadd.f32 0.0, %v1151
      %v1153 = vpop.f32.mrf.mxu0
      %v1154 = vpop.f32.mrf.mxu0
      %v1155 = vadd.f32 0.0, %v1154
      %v1156 = vpop.f32.mrf.mxu0
      %1157 = vmatprep.mubr.bf16.mxu0 %v1088
      %1158 = vmatmul.mubr.bf16.gmra.mxu0 %v1087
      %v1159 = vpop.f32.mrf.mxu0
      %v1160 = vadd.f32 0.0, %v1159
      %v1161 = vpop.f32.mrf.mxu0
      %v1162 = vpop.f32.mrf.mxu0
      %v1163 = vadd.f32 0.0, %v1162
      %v1164 = vpop.f32.mrf.mxu0
      %1165 = vmatprep.mubr.bf16.mxu0 %v1090
      %1166 = vmatmul.mubr.bf16.gmra.mxu0 %v1089
      %v1167 = vpop.f32.mrf.mxu0
      %v1168 = vadd.f32 0.0, %v1167
      %v1169 = vpop.f32.mrf.mxu0
      %v1170 = vpop.f32.mrf.mxu0
      %v1171 = vadd.f32 0.0, %v1170
      %v1172 = vpop.f32.mrf.mxu0
      %1173 = vmatprep.mubr.bf16.mxu0 %v1092
      %1174 = vmatmul.mubr.bf16.gmra.mxu0 %v1091
      %v1175 = vpop.f32.mrf.mxu0
      %v1176 = vadd.f32 0.0, %v1175
      %v1177 = vpop.f32.mrf.mxu0
      %v1178 = vpop.f32.mrf.mxu0
      %v1179 = vadd.f32 0.0, %v1178
      %v1180 = vpop.f32.mrf.mxu0
      %1181 = vmatprep.mubr.bf16.mxu0 %v1094
      %1182 = vmatmul.mubr.bf16.gmra.mxu0 %v1093
      %v1183 = vpop.f32.mrf.mxu0
      %v1184 = vadd.f32 0.0, %v1183
      %v1185 = vpop.f32.mrf.mxu0
      %v1186 = vpop.f32.mrf.mxu0
      %v1187 = vadd.f32 0.0, %v1186
      %v1188 = vpop.f32.mrf.mxu0
      %1189 = vmatprep.mubr.bf16.mxu0 %v1096
      %1190 = vmatmul.mubr.bf16.gmra.mxu0 %v1095
      %v1191 = vpop.f32.mrf.mxu0
      %v1192 = vadd.f32 0.0, %v1191
      %v1193 = vpop.f32.mrf.mxu0
      %v1194 = vpop.f32.mrf.mxu0
      %v1195 = vadd.f32 0.0, %v1194
      %v1196 = vpop.f32.mrf.mxu0
      %1197 = vmatprep.mubr.bf16.mxu0 %v1098
      %1198 = vmatmul.mubr.bf16.gmra.mxu0 %v1097
      %v1199 = vpop.f32.mrf.mxu0
      %v1200 = vadd.f32 0.0, %v1199
      %v1201 = vpop.f32.mrf.mxu0
      %v1202 = vpop.f32.mrf.mxu0
      %v1203 = vadd.f32 0.0, %v1202
      %v1204 = vpop.f32.mrf.mxu0
      %1205 = vmatprep.mubr.bf16.mxu0 %v1100
      %1206 = vmatmul.mubr.bf16.gmra.mxu0 %v1099
      %v1207 = vpop.f32.mrf.mxu0
      %v1208 = vadd.f32 0.0, %v1207
      %v1209 = vpop.f32.mrf.mxu0
      %v1210 = vpop.f32.mrf.mxu0
      %v1211 = vadd.f32 0.0, %v1210
      %v1212 = vpop.f32.mrf.mxu0
      %1213 = vdwg.mxu0
      %p1214 = scmp.eq.s32.totalorder %s24, 0
      // Predicated region
      $region45: #{fused_forward.1} parent=43 // pred_check
        %p1215 = pneg %p1214
      $region46: #{fused_forward.1} parent=43 // pred_check_branch
        %1217 = sbr.rel (%p1215) target = $region48
      $region47: #{fused_forward.1} parent=43 // pred_region
        %v1218 = vld [vmem:[%s413] sm:$0xff]
        %v1219 = vld [vmem:[%s413 + $0x8] sm:$0xff]
        %v1220 = vld [vmem:[%s413 + $0x10] sm:$0xff]
        %v1221 = vld [vmem:[%s413 + $0x18] sm:$0xff]
        %v1222 = vld [vmem:[%s413 + $0x20] sm:$0xff]
        %v1223 = vld [vmem:[%s413 + $0x28] sm:$0xff]
        %v1224 = vld [vmem:[%s413 + $0x30] sm:$0xff]
        %v1225 = vld [vmem:[%s413 + $0x38] sm:$0xff]
        %v1226 = vld [vmem:[%s413 + $0x40] sm:$0xff]
        %v1227 = vld [vmem:[%s413 + $0x48] sm:$0xff]
        %v1228 = vld [vmem:[%s413 + $0x50] sm:$0xff]
        %v1229 = vld [vmem:[%s413 + $0x58] sm:$0xff]
        %v1230 = vld [vmem:[%s413 + $0x60] sm:$0xff]
        %v1231 = vld [vmem:[%s413 + $0x68] sm:$0xff]
        %v1232 = vld [vmem:[%s413 + $0x70] sm:$0xff]
        %v1233 = vld [vmem:[%s413 + $0x78] sm:$0xff]
        %1235 = vset.pattern.permute.xlu0 0
        %1236 = vperm.xlu0 %1235, %v1218
        %v1237 = vpop.permute.xlu0 %1236
        %1240 = vset.pattern.permute.xlu0 0
        %1241 = vperm.xlu0 %1240, %v1219
        %v1242 = vpop.permute.xlu0 %1241
        %1245 = vset.pattern.permute.xlu0 0
        %1246 = vperm.xlu0 %1245, %v1220
        %v1247 = vpop.permute.xlu0 %1246
        %1250 = vset.pattern.permute.xlu0 0
        %1251 = vperm.xlu0 %1250, %v1221
        %v1252 = vpop.permute.xlu0 %1251
        %1255 = vset.pattern.permute.xlu0 0
        %1256 = vperm.xlu0 %1255, %v1222
        %v1257 = vpop.permute.xlu0 %1256
        %1260 = vset.pattern.permute.xlu0 0
        %1261 = vperm.xlu0 %1260, %v1223
        %v1262 = vpop.permute.xlu0 %1261
        %1265 = vset.pattern.permute.xlu0 0
        %1266 = vperm.xlu0 %1265, %v1224
        %v1267 = vpop.permute.xlu0 %1266
        %1270 = vset.pattern.permute.xlu0 0
        %1271 = vperm.xlu0 %1270, %v1225
        %v1272 = vpop.permute.xlu0 %1271
        %1275 = vset.pattern.permute.xlu0 0
        %1276 = vperm.xlu0 %1275, %v1226
        %v1277 = vpop.permute.xlu0 %1276
        %1280 = vset.pattern.permute.xlu0 0
        %1281 = vperm.xlu0 %1280, %v1227
        %v1282 = vpop.permute.xlu0 %1281
        %1285 = vset.pattern.permute.xlu0 0
        %1286 = vperm.xlu0 %1285, %v1228
        %v1287 = vpop.permute.xlu0 %1286
        %1290 = vset.pattern.permute.xlu0 0
        %1291 = vperm.xlu0 %1290, %v1229
        %v1292 = vpop.permute.xlu0 %1291
        %1295 = vset.pattern.permute.xlu0 0
        %1296 = vperm.xlu0 %1295, %v1230
        %v1297 = vpop.permute.xlu0 %1296
        %1300 = vset.pattern.permute.xlu0 0
        %1301 = vperm.xlu0 %1300, %v1231
        %v1302 = vpop.permute.xlu0 %1301
        %1305 = vset.pattern.permute.xlu0 0
        %1306 = vperm.xlu0 %1305, %v1232
        %v1307 = vpop.permute.xlu0 %1306
        %1310 = vset.pattern.permute.xlu0 0
        %1311 = vperm.xlu0 %1310, %v1233
        %v1312 = vpop.permute.xlu0 %1311
        %v1314 = vadd.f32 %v1152, %v1237
        %v1315 = vadd.f32 %v1155, %v1242
        %v1316 = vadd.f32 %v1160, %v1247
        %v1317 = vadd.f32 %v1163, %v1252
        %v1318 = vadd.f32 %v1168, %v1257
        %v1319 = vadd.f32 %v1171, %v1262
        %v1320 = vadd.f32 %v1176, %v1267
        %v1321 = vadd.f32 %v1179, %v1272
        %v1322 = vadd.f32 %v1184, %v1277
        %v1323 = vadd.f32 %v1187, %v1282
        %v1324 = vadd.f32 %v1192, %v1287
        %v1325 = vadd.f32 %v1195, %v1292
        %v1326 = vadd.f32 %v1200, %v1297
        %v1327 = vadd.f32 %v1203, %v1302
        %v1328 = vadd.f32 %v1208, %v1307
        %v1329 = vadd.f32 %v1211, %v1312
        %vm1330 = vcmask 523264
        %1331 = vst.msk [vmem:[#allocation2] sm:$0xff] %vm1330, %v1314
        %1332 = vst.msk [vmem:[#allocation2 + $0x8] sm:$0xff] %vm1330, %v1315
        %1333 = vst.msk [vmem:[#allocation2 + $0x10] sm:$0xff] %vm1330, %v1316
        %1334 = vst.msk [vmem:[#allocation2 + $0x18] sm:$0xff] %vm1330, %v1317
        %1335 = vst.msk [vmem:[#allocation2 + $0x20] sm:$0xff] %vm1330, %v1318
        %1336 = vst.msk [vmem:[#allocation2 + $0x28] sm:$0xff] %vm1330, %v1319
        %1337 = vst.msk [vmem:[#allocation2 + $0x30] sm:$0xff] %vm1330, %v1320
        %1338 = vst.msk [vmem:[#allocation2 + $0x38] sm:$0xff] %vm1330, %v1321
        %1339 = vst.msk [vmem:[#allocation2 + $0x40] sm:$0xff] %vm1330, %v1322
        %1340 = vst.msk [vmem:[#allocation2 + $0x48] sm:$0xff] %vm1330, %v1323
        %1341 = vst.msk [vmem:[#allocation2 + $0x50] sm:$0xff] %vm1330, %v1324
        %1342 = vst.msk [vmem:[#allocation2 + $0x58] sm:$0xff] %vm1330, %v1325
        %1343 = vst.msk [vmem:[#allocation2 + $0x60] sm:$0xff] %vm1330, %v1326
        %1344 = vst.msk [vmem:[#allocation2 + $0x68] sm:$0xff] %vm1330, %v1327
        %1345 = vst.msk [vmem:[#allocation2 + $0x70] sm:$0xff] %vm1330, %v1328
        %1346 = vst.msk [vmem:[#allocation2 + $0x78] sm:$0xff] %vm1330, %v1329
      $region48: #{fused_forward.1} parent=43 // pred_fallthru
        _
      %p1347 = scmp.gt.s32.totalorder %s24, 0
      // Predicated region
      $region49: #{fused_forward.1} parent=43 // pred_check
        %p1348 = pneg %p1347
      $region50: #{fused_forward.1} parent=43 // pred_check_branch
        %1350 = sbr.rel (%p1348) target = $region52
      $region51: #{fused_forward.1} parent=43 // pred_region
        %v1351 = vld [vmem:[#allocation2] sm:$0xff]
        %v1352 = vld [vmem:[#allocation2 + $0x8] sm:$0xff]
        %v1353 = vld [vmem:[#allocation2 + $0x10] sm:$0xff]
        %v1354 = vld [vmem:[#allocation2 + $0x18] sm:$0xff]
        %v1355 = vld [vmem:[#allocation2 + $0x20] sm:$0xff]
        %v1356 = vld [vmem:[#allocation2 + $0x28] sm:$0xff]
        %v1357 = vld [vmem:[#allocation2 + $0x30] sm:$0xff]
        %v1358 = vld [vmem:[#allocation2 + $0x38] sm:$0xff]
        %v1359 = vld [vmem:[#allocation2 + $0x40] sm:$0xff]
        %v1360 = vld [vmem:[#allocation2 + $0x48] sm:$0xff]
        %v1361 = vld [vmem:[#allocation2 + $0x50] sm:$0xff]
        %v1362 = vld [vmem:[#allocation2 + $0x58] sm:$0xff]
        %v1363 = vld [vmem:[#allocation2 + $0x60] sm:$0xff]
        %v1364 = vld [vmem:[#allocation2 + $0x68] sm:$0xff]
        %v1365 = vld [vmem:[#allocation2 + $0x70] sm:$0xff]
        %v1366 = vld [vmem:[#allocation2 + $0x78] sm:$0xff]
        %v1367 = vadd.f32 %v1351, %v1152
        %v1368 = vadd.f32 %v1352, %v1155
        %v1369 = vadd.f32 %v1353, %v1160
        %v1370 = vadd.f32 %v1354, %v1163
        %v1371 = vadd.f32 %v1355, %v1168
        %v1372 = vadd.f32 %v1356, %v1171
        %v1373 = vadd.f32 %v1357, %v1176
        %v1374 = vadd.f32 %v1358, %v1179
        %v1375 = vadd.f32 %v1359, %v1184
        %v1376 = vadd.f32 %v1360, %v1187
        %v1377 = vadd.f32 %v1361, %v1192
        %v1378 = vadd.f32 %v1362, %v1195
        %v1379 = vadd.f32 %v1363, %v1200
        %v1380 = vadd.f32 %v1364, %v1203
        %v1381 = vadd.f32 %v1365, %v1208
        %v1382 = vadd.f32 %v1366, %v1211
        %vm1383 = vcmask 523264
        %1384 = vst.msk [vmem:[#allocation2] sm:$0xff] %vm1383, %v1367
        %1385 = vst.msk [vmem:[#allocation2 + $0x8] sm:$0xff] %vm1383, %v1368
        %1386 = vst.msk [vmem:[#allocation2 + $0x10] sm:$0xff] %vm1383, %v1369
        %1387 = vst.msk [vmem:[#allocation2 + $0x18] sm:$0xff] %vm1383, %v1370
        %1388 = vst.msk [vmem:[#allocation2 + $0x20] sm:$0xff] %vm1383, %v1371
        %1389 = vst.msk [vmem:[#allocation2 + $0x28] sm:$0xff] %vm1383, %v1372
        %1390 = vst.msk [vmem:[#allocation2 + $0x30] sm:$0xff] %vm1383, %v1373
        %1391 = vst.msk [vmem:[#allocation2 + $0x38] sm:$0xff] %vm1383, %v1374
        %1392 = vst.msk [vmem:[#allocation2 + $0x40] sm:$0xff] %vm1383, %v1375
        %1393 = vst.msk [vmem:[#allocation2 + $0x48] sm:$0xff] %vm1383, %v1376
        %1394 = vst.msk [vmem:[#allocation2 + $0x50] sm:$0xff] %vm1383, %v1377
        %1395 = vst.msk [vmem:[#allocation2 + $0x58] sm:$0xff] %vm1383, %v1378
        %1396 = vst.msk [vmem:[#allocation2 + $0x60] sm:$0xff] %vm1383, %v1379
        %1397 = vst.msk [vmem:[#allocation2 + $0x68] sm:$0xff] %vm1383, %v1380
        %1398 = vst.msk [vmem:[#allocation2 + $0x70] sm:$0xff] %vm1383, %v1381
        %1399 = vst.msk [vmem:[#allocation2 + $0x78] sm:$0xff] %vm1383, %v1382
      $region52: #{fused_forward.1} parent=43 // pred_fallthru
        _
      // Predicated region
      $region53: #{fused_forward.1} parent=43 // pred_check
        %p1400 = pneg %p1214
      $region54: #{fused_forward.1} parent=43 // pred_check_branch
        %1402 = sbr.rel (%p1400) target = $region56
      $region55: #{fused_forward.1} parent=43 // pred_region
        %v1403 = vld [vmem:[#allocation2] sm:$0xff]
        %v1404 = vld [vmem:[#allocation2 + $0x8] sm:$0xff]
        %v1405 = vld [vmem:[#allocation2 + $0x10] sm:$0xff]
        %v1406 = vld [vmem:[#allocation2 + $0x18] sm:$0xff]
        %v1407 = vld [vmem:[#allocation2 + $0x20] sm:$0xff]
        %v1408 = vld [vmem:[#allocation2 + $0x28] sm:$0xff]
        %v1409 = vld [vmem:[#allocation2 + $0x30] sm:$0xff]
        %v1410 = vld [vmem:[#allocation2 + $0x38] sm:$0xff]
        %v1411 = vld [vmem:[#allocation2 + $0x40] sm:$0xff]
        %v1412 = vld [vmem:[#allocation2 + $0x48] sm:$0xff]
        %v1413 = vld [vmem:[#allocation2 + $0x50] sm:$0xff]
        %v1414 = vld [vmem:[#allocation2 + $0x58] sm:$0xff]
        %v1415 = vld [vmem:[#allocation2 + $0x60] sm:$0xff]
        %v1416 = vld [vmem:[#allocation2 + $0x68] sm:$0xff]
        %v1417 = vld [vmem:[#allocation2 + $0x70] sm:$0xff]
        %v1418 = vld [vmem:[#allocation2 + $0x78] sm:$0xff]
        %vm1419 = vcmask 523264
        %1420 = vst.msk [vmem:[%s423] sm:$0xff] %vm1419, %v1403
        %1421 = vst.msk [vmem:[%s423 + $0x8] sm:$0xff] %vm1419, %v1404
        %1422 = vst.msk [vmem:[%s423 + $0x10] sm:$0xff] %vm1419, %v1405
        %1423 = vst.msk [vmem:[%s423 + $0x18] sm:$0xff] %vm1419, %v1406
        %1424 = vst.msk [vmem:[%s423 + $0x20] sm:$0xff] %vm1419, %v1407
        %1425 = vst.msk [vmem:[%s423 + $0x28] sm:$0xff] %vm1419, %v1408
        %1426 = vst.msk [vmem:[%s423 + $0x30] sm:$0xff] %vm1419, %v1409
        %1427 = vst.msk [vmem:[%s423 + $0x38] sm:$0xff] %vm1419, %v1410
        %1428 = vst.msk [vmem:[%s423 + $0x40] sm:$0xff] %vm1419, %v1411
        %1429 = vst.msk [vmem:[%s423 + $0x48] sm:$0xff] %vm1419, %v1412
        %1430 = vst.msk [vmem:[%s423 + $0x50] sm:$0xff] %vm1419, %v1413
        %1431 = vst.msk [vmem:[%s423 + $0x58] sm:$0xff] %vm1419, %v1414
        %1432 = vst.msk [vmem:[%s423 + $0x60] sm:$0xff] %vm1419, %v1415
        %1433 = vst.msk [vmem:[%s423 + $0x68] sm:$0xff] %vm1419, %v1416
        %1434 = vst.msk [vmem:[%s423 + $0x70] sm:$0xff] %vm1419, %v1417
        %1435 = vst.msk [vmem:[%s423 + $0x78] sm:$0xff] %vm1419, %v1418
      $region56: #{fused_forward.1} parent=43 // pred_fallthru
        _
      %s1436 = smul.u32 16, %s22
      %p1437 = scmp.lt.s32.totalorder %s23, 1
      %s1438 = scalar_select %p1437, %s23, 1
      %p1439 = scmp.lt.s32.totalorder %s1436, 15
      %s1440 = scalar_select %p1439, %s1436, 15
      %s1441 = smul.addr %s1438, 16
      %s1442 = sadd.s32 %s1440, %s1441
      %s1443 = smul.addr %s1442, 8
      %s1444 = scalar_lea.vmem %s6, %s1443
      // Predicated region
      $region57: #{fused_forward.1} parent=43 // pred_check
        %p1445 = pneg %p216
      $region58: #{fused_forward.1} parent=43 // pred_check_branch
        %1447 = sbr.rel (%p1445) target = $region60
      $region59: #{fused_forward.1} parent=43 // pred_region
        %s1448 = smul.u32 16, %s22
      $region60: #{fused_forward.1} parent=43 // pred_fallthru
        _
    $region44: #{fused_forward.1} parent=5 // pred_fallthru
      _
    %p1449 = scmp.le.s32.totalorder 2, %s12
    // Predicated region
    $region61: #{fused_forward.1} parent=5 // pred_check
      %p1450 = pneg %p1449
    $region62: #{fused_forward.1} parent=5 // pred_check_branch
      %1452 = sbr.rel (%p1450) target = $region64
    $region63: #{fused_forward.1} parent=5 // pred_region
      %s1453 = ssub.s32 %s12, 2
      // Predicated region
      $region65: #{fused_forward.1} parent=63 // pred_check
        %p1454 = pneg %p222
      $region66: #{fused_forward.1} parent=63 // pred_check_branch
        %1456 = sbr.rel (%p1454) target = $region68
      $region67: #{fused_forward.1} parent=63 // pred_region
        %s1457 = smul.u32 16, %s25
        %p1458 = scmp.lt.s32.totalorder %s26, 1
        %s1459 = scalar_select %p1458, %s26, 1
        %p1460 = scmp.lt.s32.totalorder %s1457, 15
        %s1461 = scalar_select %p1460, %s1457, 15
        %s1462 = smul.addr %s1459, 16
        %s1463 = sadd.s32 %s1461, %s1462
        %s1464 = smul.addr %s1463, 8
        %s1465 = scalar_lea.vmem %s6, %s1464
      $region68: #{fused_forward.1} parent=63 // pred_fallthru
        _
    $region64: #{fused_forward.1} parent=5 // pred_fallthru
      _
  $region6: #{fused_forward.1} parent=0 // loop_footer
    %s16 = sadd.s32 1, %s12
  $region7: #{fused_forward.1} parent=0 // loop_footer_branch
    %11 = sbr.rel target = $region3
  $region8: #{fused_forward.1} parent=0 // loop_exit
    _

</llo_original>
